<compile_context>
chip_gen: v6e
topology: v6e:2x2x1
jax: 0.10.0
libtpu: 0.0.40
codegen_flags: <defaults>
</compile_context>

<pallas_src>
import jax
import jax.numpy as jnp
from jax.experimental import pallas as pl
from jax.experimental.pallas import tpu as pltpu

_LANE = 128
_TARGET_BLOCK_BYTES = 8 * 1024 * 1024   # per-block VMEM budget (~8 MiB)
_MIN_BLOCK_BYTES = 1 * 1024 * 1024      # don't shrink blocks below ~1 MiB
_MIN_GRID_STEPS = 4                     # pipeline depth + 2 TCs on v7x
_VMEM_LIMIT_BYTES = 48 * 1024 * 1024    # ~4 x block (in+out double-buffered) + headroom


def _sublane_pack(dtype) -> int:
    """Rows per packed sublane group for this dtype (8 f32 / 16 bf16 / 32 int8)."""
    return {4: 8, 2: 16, 1: 32}.get(jnp.dtype(dtype).itemsize, 8)


def _rezero_scale_kernel(g_ref, x_ref, o_ref):
    # g_ref: (1,) f32 in SMEM; x_ref / o_ref: (tile_rows, 128) in VMEM.
    # Compute in f32 (g is an f32 parameter, matching the PyTorch module),
    # store back in the input dtype.  The op is HBM-bound, so the upcast is
    # hidden under the DMA.
    g = g_ref[0]
    o_ref[...] = (x_ref[...].astype(jnp.float32) * g).astype(o_ref.dtype)


def rezero_scale(x, g):
    """Pallas implementation of `x * g` with a scalar parameter g of shape (1,)."""
    orig_shape = x.shape
    total = x.size
    if total == 0:
        return x

    itemsize = jnp.dtype(x.dtype).itemsize
    pack = _sublane_pack(x.dtype)

    # Always present a lane-dense (rows, 128) slab with rows % pack == 0:
    # pad the flattened array up to a multiple of pack*128 and slice back
    # afterwards.  This keeps every store a full-width unmasked vst and every
    # block shape (8k, 128)-legal, even for sub-128 feature dims.
    chunk = pack * _LANE
    padded_total = pl.cdiv(total, chunk) * chunk
    flat = x.reshape(-1)
    if padded_total != total:
        flat = jnp.pad(flat, (0, padded_total - total))
    rows = padded_total // _LANE
    x2 = flat.reshape(rows, _LANE)

    # Block sizing by byte budget.  If more than one block is needed, aim for
    # at least _MIN_GRID_STEPS steps (pipelining + both TCs on v7x) while
    # keeping each block between ~1 MiB and ~8 MiB.
    row_bytes = _LANE * itemsize
    max_rows = max(pack, (_TARGET_BLOCK_BYTES // row_bytes) // pack * pack)
    min_rows = max(pack, (_MIN_BLOCK_BYTES // row_bytes) // pack * pack)
    desired = pl.cdiv(pl.cdiv(rows, _MIN_GRID_STEPS), pack) * pack
    tile_rows = min(rows, min(max_rows, max(min_rows, desired)))
    grid = (pl.cdiv(rows, tile_rows),)

    g_arr = jnp.asarray(g, dtype=jnp.float32).reshape(1)
    bytes_accessed = 2 * padded_total * itemsize + 4

    out2 = pl.pallas_call(
        _rezero_scale_kernel,
        out_shape=jax.ShapeDtypeStruct((rows, _LANE), x.dtype),
        grid=grid,
        in_specs=[
            pl.BlockSpec(memory_space=pltpu.MemorySpace.SMEM),   # scalar g
            pl.BlockSpec((tile_rows, _LANE), lambda i: (i, 0)),  # x tile
        ],
        out_specs=pl.BlockSpec((tile_rows, _LANE), lambda i: (i, 0)),
        compiler_params=pltpu.CompilerParams(
            dimension_semantics=("parallel",),
            vmem_limit_bytes=_VMEM_LIMIT_BYTES,
        ),
        cost_estimate=pl.CostEstimate(
            flops=padded_total, transcendentals=0, bytes_accessed=bytes_accessed),
    )(g_arr, x2)

    out = out2.reshape(-1)
    if padded_total != total:
        out = out[:total]
    return out.reshape(orig_shape)


def rezero_forward(fn, x, g, **kwargs):
    """Rezero.forward: run the wrapped fn, scale its primary output by g."""
    # TODO(synk): `self.fn` is an arbitrary wrapped sub-module with no single
    # Pallas equivalent; it runs in plain JAX — only the `x * g` rescale is a
    # Pallas kernel.  When fn is itself plain JAX, fusing `y * g` into fn's
    # epilogue in JAX (skipping this kernel) removes the extra HBM pass.
    out = fn(x, **kwargs)
    if not isinstance(out, (tuple, list)):
        out = (out,)
    y, *rest = out
    return (rezero_scale(y, g), *rest)


if __name__ == "__main__":
    key = jax.random.PRNGKey(0)
    batch, seq, hidden = 2, 8, 32
    x = jax.random.normal(key, (batch, seq, hidden), dtype=jnp.float32)

    # Demo wrapped fn returning (primary, aux), like the torch sub-modules it wraps.
    def fn(v):
        return jnp.tanh(v), jnp.sum(v)

    # Module init: g = zeros(1)  -> output is exactly zero.
    g0 = jnp.zeros((1,), jnp.float32)
    out0, aux0 = rezero_forward(fn, x, g0)
    out0 = jax.block_until_ready(out0)
    assert out0.shape == x.shape, out0.shape
    assert jnp.allclose(out0, jnp.zeros_like(x)), "g=0 path mismatch"

    # Non-trivial g to exercise the scaling math against the reference.
    g1 = jnp.asarray([0.37], dtype=jnp.float32)
    out1, aux1 = rezero_forward(fn, x, g1)
    out1 = jax.block_until_ready(out1)
    ref1 = jnp.tanh(x) * g1[0]
    assert jnp.allclose(out1, ref1, atol=1e-6, rtol=1e-6), "mismatch vs reference"
    assert jnp.allclose(aux1, jnp.sum(x)), "aux passthrough mismatch"

    # Odd (non-multiple-of-128) element count -> exercises the pad/slice path.
    x_odd = jax.random.normal(jax.random.PRNGKey(1), (3, 5, 7), dtype=jnp.float32)
    out_odd = jax.block_until_ready(rezero_scale(x_odd, g1))
    assert out_odd.shape == x_odd.shape
    assert jnp.allclose(out_odd, x_odd * g1[0], atol=1e-6, rtol=1e-6), "padded path mismatch"

    # bf16 input keeps its dtype, scale applied in f32 then downcast.
    x_bf = x.astype(jnp.bfloat16)
    out_bf = jax.block_until_ready(rezero_scale(x_bf, g1))
    assert out_bf.dtype == jnp.bfloat16
    assert jnp.allclose(out_bf.astype(jnp.float32),
                        (x_bf.astype(jnp.float32) * g1[0]).astype(jnp.bfloat16).astype(jnp.float32),
                        atol=1e-2, rtol=1e-2), "bf16 path mismatch"

    print("KERNEL_OK")
</pallas_src>

<mosaic_0001>
module attributes {stable_mosaic.version = 11 : i64} {
  func.func @_rezero_scale_kernel(%arg0: i32, %arg1: memref<1xf32, #tpu.memory_space<smem>>, %arg2: memref<8x128xf32, #tpu.memory_space<vmem>>, %arg3: memref<8x128xf32, #tpu.memory_space<vmem>>) attributes {dimension_semantics = [#tpu.dimension_semantics<parallel>], iteration_bounds = array<i64: 1>, scalar_prefetch = 0 : i64, scratch_operands = 0 : i64, tpu.core_type = #tpu.core_type<tc>, window_params = [{transform_indices = @transform_0, window_bounds = array<i64: 1>}, {transform_indices = @transform_1, window_bounds = array<i64: 8, 128>}, {transform_indices = @transform_2, window_bounds = array<i64: 8, 128>}]} {
    %c0 = arith.constant 0 : index
    %0 = memref.load %arg1[%c0] : memref<1xf32, #tpu.memory_space<smem>>
    %c0_0 = arith.constant 0 : index
    %c0_1 = arith.constant 0 : index
    %1 = vector.load %arg2[%c0_0, %c0_1] : memref<8x128xf32, #tpu.memory_space<vmem>>, vector<8x128xf32>
    %2 = vector.broadcast %0 : f32 to vector<8x128xf32>
    %3 = arith.mulf %1, %2 : vector<8x128xf32>
    %c0_2 = arith.constant 0 : index
    %c0_3 = arith.constant 0 : index
    %4 = vector.load %arg3[%c0_2, %c0_3] : memref<8x128xf32, #tpu.memory_space<vmem>>, vector<8x128xf32>
    tpu.vector_store %arg3[%c0_2, %c0_3], %3 {strides = array<i32>} : memref<8x128xf32, #tpu.memory_space<vmem>>, vector<8x128xf32>,
    return
  }
  func.func @transform_0(%arg0: i32) -> i32 {
    %c0_i32 = arith.constant 0 : i32
    %c0_i32_0 = arith.constant 0 : i32
    return %c0_i32 : i32
  }
  func.func @transform_1(%arg0: i32) -> (i32, i32) {
    %c0_i32 = arith.constant 0 : i32
    %c0_i32_0 = arith.constant 0 : i32
    return %arg0, %c0_i32 : i32, i32
  }
  func.func @transform_2(%arg0: i32) -> (i32, i32) {
    %c0_i32 = arith.constant 0 : i32
    %c0_i32_0 = arith.constant 0 : i32
    return %arg0, %c0_i32 : i32, i32
  }
}

</mosaic_0001>

<llo_original>
// kernel: tpu_custom_call.1
$region0: #{tpu_custom_call.1}
  #allocation0 [shape = 'u32[]', space=smem, size = 0x4, offset = 0x4, fixed_abs, tag = 'smem constant byte address 0x4 - core index']
  #allocation1 [shape = 'u32[144,128]{1,0:T(1,128)}', space=vmem, size = 0x12000, scoped, tag = 'internal scratch']
  #allocation2 [shape = 'f32[1]{0:T(128)S(6)}', space=smem, size = 0x200, scoped, tag = 'scoped memory for tpu_custom_call.1']
  %s0 = inlined_call_operand.<no memory space> [shape: f32[1], index: 0, kind: input, shape index: {}]
  %s1 = inlined_call_operand.hbm [shape: f32[8,128], index: 1, kind: input, shape index: {}]
  %s2 = inlined_call_operand.hbm [shape: f32[8,128], index: 2, kind: output, shape index: {}]
  %s3 = sld [smem:[#allocation0]]
  $region22: #{tpu_custom_call.1} parent=0
    _
  %s5 = ssub.s32 1, %s3
  %s6 = scalar_select 0, %s5, %s3
  %7 = sst [smem:[#allocation2]] %s0
  $region1: #{tpu_custom_call.1} parent=0
    #allocation3 [shape = 'u8[4096]{0}', space=vmem, size = 0x1000, scoped, tag = 'input window, operand 1, single buffered']
    #allocation4 [shape = 's32[1]{0}', space=sflag, size = 0x4, scoped, tag = 'scoped memory for tpu_custom_call.1']
    #allocation5 [shape = 's32[1]{0}', space=sflag, size = 0x4, scoped, tag = 'scoped memory for tpu_custom_call.1']
    #allocation6 [shape = 'u8[4096]{0}', space=vmem, size = 0x1000, scoped, tag = 'output window, operand 0, single buffered']
    %8 = vsyncpa [#allocation4], 0
    %9 = vsyncpa [#allocation5], 0
    // Predicated region
    $region2: #{tpu_custom_call.1} parent=1 // pred_check
      _
    $region3: #{tpu_custom_call.1} parent=1 // pred_check_branch
      %11 = sbr.rel (0) target = $region5
    $region4: #{tpu_custom_call.1} parent=1 // pred_region
      _
    $region5: #{tpu_custom_call.1} parent=1 // pred_fallthru
      _
    // Predicated region
    $region6: #{tpu_custom_call.1} parent=1 // pred_check
      _
    $region7: #{tpu_custom_call.1} parent=1 // pred_check_branch
      %13 = sbr.rel (0) target = $region9
    $region8: #{tpu_custom_call.1} parent=1 // pred_region
      %s15 = ssub.s32 128, 128
      %16 = vsyncadd [#allocation4], %s15
      %s18 = sshll.u32 [#allocation3], 4
      %s19 = int_to_ptr.vmem [resolvable:$true] %s18
      %21 = dma.hbm_to_vmem [thread:$0]  %s1, 128, %s19, [#allocation4]
    $region9: #{tpu_custom_call.1} parent=1 // pred_fallthru
      _
    // Predicated region
    $region10: #{tpu_custom_call.1} parent=1 // pred_check
      _
    $region11: #{tpu_custom_call.1} parent=1 // pred_check_branch
      %23 = sbr.rel (0) target = $region13
    $region12: #{tpu_custom_call.1} parent=1 // pred_region
      %24 = dma.done [#allocation4], 128
    $region13: #{tpu_custom_call.1} parent=1 // pred_fallthru
      _
    %s25 = sld [smem:[#allocation2]]
    %v26 = vld [vmem:[#allocation3] sm:$0xff]
    %v27 = vstv %s25
    %v28 = vmul.f32 %v26, %v27
    %29 = vst [vmem:[#allocation6] sm:$0xff] %v28
    // Predicated region
    $region14: #{tpu_custom_call.1} parent=1 // pred_check
      _
    $region15: #{tpu_custom_call.1} parent=1 // pred_check_branch
      %31 = sbr.rel (0) target = $region17
    $region16: #{tpu_custom_call.1} parent=1 // pred_region
      %s33 = ssub.s32 128, 128
      %34 = vsyncadd [#allocation5], %s33
      %s36 = sshll.u32 [#allocation6], 4
      %s37 = int_to_ptr.vmem [resolvable:$true] %s36
      %39 = dma.vmem_to_hbm [thread:$0]  %s37, 128, %s2, [#allocation5]
    $region17: #{tpu_custom_call.1} parent=1 // pred_fallthru
      _
    // Predicated region
    $region18: #{tpu_custom_call.1} parent=1 // pred_check
      _
    $region19: #{tpu_custom_call.1} parent=1 // pred_check_branch
      %41 = sbr.rel (0) target = $region21
    $region20: #{tpu_custom_call.1} parent=1 // pred_region
      %42 = dma.done [#allocation5], 128
    $region21: #{tpu_custom_call.1} parent=1 // pred_fallthru
      _
    %43 = vsyncpa [#allocation4], 1
    %44 = vsyncpa [#allocation5], 1

</llo_original>
